<compile_context>
chip_gen: v7x
topology: tpu7x:2x2x1
jax: 0.10.0
libtpu: 0.0.40
codegen_flags: <defaults>
</compile_context>

<pallas_src>
import functools

import jax
import jax.numpy as jnp
from jax.experimental import pallas as pl
from jax.experimental.pallas import tpu as pltpu


# ----------------------------------------------------------------------------
# Helpers (pure-Python int math so grid/tile sizes are static)
# ----------------------------------------------------------------------------
def _cdiv(a, b):
    return -(-a // b)


def _round_up(a, b):
    return _cdiv(a, b) * b


# ----------------------------------------------------------------------------
# Kernel (transposed / lane-dense layout: activations are (features, TN))
# ----------------------------------------------------------------------------
def _odefunc_kernel(has_align, compute_dtype, t_ref, *refs):
    """One lane-tile (TN batch columns) of the fused ODE func.

    has_align / compute_dtype are Python-static (two specializations traced).
    t_ref is a (1,1) f32 scalar in SMEM.  Weights are full-array VMEM residents
    (constant index_map); activations are (D, TN) column tiles with TN a
    multiple of 128 (batch on lanes).
    """
    if has_align:
        (ta_ref, yx_ref,
         w0_ref, w0t_ref, b0_ref,
         w1_ref, b1_ref, w2_ref, b2_ref, out_ref) = refs
    else:
        (yx_ref,
         w0_ref, w0t_ref, b0_ref,
         w1_ref, b1_ref, w2_ref, b2_ref, out_ref) = refs

    t = t_ref[0, 0]  # f32 scalar from SMEM

    # Layer 0: single merged MXU matmul (H, DY+DX) @ (DY+DX, TN), f32 accumulate.
    acc = jnp.dot(w0_ref[...], yx_ref[...],
                  preferred_element_type=jnp.float32) + b0_ref[...]
    if has_align:
        scale = ta_ref[...].astype(jnp.float32)        # (1, TN)
        acc = acc + w0t_ref[...] * (t * scale)         # (H,1)*(1,TN) outer product (VPU)
    else:
        acc = acc + t * w0t_ref[...]                   # (H,1) lane-broadcast
    h = jnp.tanh(acc)                                  # f32 tanh on full-width vregs

    # Layer 1
    h = jnp.tanh(jnp.dot(w1_ref[...], h.astype(compute_dtype),
                         preferred_element_type=jnp.float32) + b1_ref[...])
    # Layer 2 (no activation)
    h = jnp.dot(w2_ref[...], h.astype(compute_dtype),
                preferred_element_type=jnp.float32) + b2_ref[...]

    if has_align:
        h = scale * h                                  # final t_align scaling fused here

    out_ref[...] = h.astype(out_ref.dtype)             # (d_out, TN) unmasked lane-dense store


# ----------------------------------------------------------------------------
# Params
# ----------------------------------------------------------------------------
def init_params(config, key):
    """Deterministic xavier_normal weights, zero biases. PyTorch layout: W (out, in)."""
    params = []
    n_layers = len(config) - 1
    keys = jax.random.split(key, n_layers)
    for l in range(n_layers):
        fan_in, fan_out = config[l], config[l + 1]
        std = jnp.sqrt(2.0 / (fan_in + fan_out))        # xavier_normal, gain=1
        w = std * jax.random.normal(keys[l], (fan_out, fan_in), dtype=jnp.float32)
        b = jnp.zeros((fan_out,), dtype=jnp.float32)
        params.append((w, b))
    return params


def prepare_params(params, compute_dtype=jnp.bfloat16):
    """One-time (outside the ODE-solver loop) preparation of kernel weights.

    Splits the first layer's weight into the t-column (kept f32, used on the
    VPU) and the merged y/X block (MXU operand, cast to compute_dtype), and
    casts the other matmul weights.  Biases stay f32, reshaped to (out, 1) for
    the transposed layout.
    """
    # TODO(synk): only the 3-Linear case (len(config) == 4) is specialized here,
    # matching the repo's usage; arbitrary depths would need a generic variant.
    assert len(params) == 3, "kernel specialization expects len(config) == 4"
    (w0, b0), (w1, b1), (w2, b2) = params
    w0t = w0[:, 0:1].astype(jnp.float32)                 # (H, 1)  t-column
    w0yx = w0[:, 1:].astype(compute_dtype)                # (H, DY+DX) merged block
    return ((w0t, w0yx, b0.reshape(-1, 1).astype(jnp.float32)),
            (w1.astype(compute_dtype), b1.reshape(-1, 1).astype(jnp.float32)),
            (w2.astype(compute_dtype), b2.reshape(-1, 1).astype(jnp.float32)))


# ----------------------------------------------------------------------------
# Forward
# ----------------------------------------------------------------------------
def odefunc_time_forward(t, y, X, kparams, t_align=None, block_cols=4096):
    """Matches ODEFuncTime.forward for a 3-Linear config (len(config) == 4).

    `kparams` comes from prepare_params().  Inputs are standard (N, D) row
    layout; internally everything is transposed to the lane-dense (D, N)
    layout the kernel uses.  (If the ODE state is kept transposed across the
    solver, the wrapper transposes disappear.)
    """
    assert y.shape[0] == X.shape[0]
    n, dy = y.shape
    dx = X.shape[1]
    (w0t, w0yx, b0), (w1, b1), (w2, b2) = kparams
    hidden, kin = w0yx.shape
    d_out = w2.shape[0]
    assert kin == dy + dx
    compute_dtype = w0yx.dtype

    has_align = t_align is not None

    # Lane-dense transposed inputs: one fused concat+transpose, batch on lanes.
    aug_yx = jnp.concatenate([y.astype(compute_dtype),
                              X.astype(compute_dtype)], axis=1).T      # (DY+DX, N)
    if has_align:
        assert t_align.shape[0] == n
        ta_t = jnp.reshape(t_align.astype(jnp.float32), (1, n))        # (1, N)

    # Tile selection: TN is a multiple of 128 (lane width); pad N only up to
    # TN * n_blocks.  Keep >= 2 blocks when there is enough work so the
    # "parallel" grid axis shards across v7x's two TensorCores.
    LANES = 128
    n128 = _round_up(n, LANES)
    n_blocks = _cdiv(n128, block_cols)
    if n_blocks == 1 and n128 >= 2048:
        n_blocks = 2
    tn = _round_up(_cdiv(n128, n_blocks), LANES)
    n_pad = tn * n_blocks
    if n_pad != n:
        pad = n_pad - n
        aug_yx = jnp.pad(aug_yx, ((0, 0), (0, pad)))
        if has_align:
            ta_t = jnp.pad(ta_t, ((0, 0), (0, pad)))
    grid = (n_blocks,)

    t_arr = jnp.asarray(t, dtype=jnp.float32).reshape(1, 1)

    col_spec = lambda d: pl.BlockSpec((d, tn), lambda i: (0, i))
    full_spec = lambda a: pl.BlockSpec(a.shape, lambda i: (0,) * a.ndim)

    in_specs = [pl.BlockSpec((1, 1), lambda i: (0, 0),
                             memory_space=pltpu.MemorySpace.SMEM)]
    args = [t_arr]
    if has_align:
        in_specs.append(col_spec(1))
        args.append(ta_t)
    in_specs += [col_spec(dy + dx),
                 full_spec(w0yx), full_spec(w0t), full_spec(b0),
                 full_spec(w1), full_spec(b1), full_spec(w2), full_spec(b2)]
    args += [aug_yx, w0yx, w0t, b0, w1, b1, w2, b2]

    out_t = pl.pallas_call(
        functools.partial(_odefunc_kernel, has_align, compute_dtype),
        out_shape=jax.ShapeDtypeStruct((d_out, n_pad), jnp.float32),
        grid=grid,
        in_specs=in_specs,
        out_specs=pl.BlockSpec((d_out, tn), lambda i: (0, i)),
        compiler_params=pltpu.CompilerParams(
            dimension_semantics=("parallel",)),
    )(*args)

    # Back to the module's (N, d_out) row layout (free if caller keeps state
    # transposed across the solver).
    return out_t[:, :n].T


# ----------------------------------------------------------------------------
# Reference (pure JAX, PyTorch-layout params)
# ----------------------------------------------------------------------------
def _reference(t, y, X, params, t_align=None):
    n = y.shape[0]
    scale = (jnp.ones((n, 1), jnp.float32) if t_align is None
             else t_align.astype(jnp.float32).reshape(n, 1))
    h = jnp.concatenate([jnp.float32(t) * scale,
                         y.astype(jnp.float32),
                         X.astype(jnp.float32)], axis=1)
    for (w, b) in params[:-1]:
        h = jnp.tanh(h @ w.T + b.reshape(1, -1))
    w, b = params[-1]
    h = h @ w.T + b.reshape(1, -1)
    return h if t_align is None else scale * h


# ----------------------------------------------------------------------------
if __name__ == "__main__":
    # config = [in_dim, hidden, hidden, out_dim]; in_dim = 1 + dim_y + dim_X
    N, DIM_Y, DIM_X = 8, 16, 15
    config = [1 + DIM_Y + DIM_X, 32, 32, 16]

    key = jax.random.PRNGKey(0)
    kp, ky, kx, ka = jax.random.split(key, 4)
    params = init_params(config, kp)

    y = jax.random.normal(ky, (N, DIM_Y), dtype=jnp.float32)
    X = jax.random.normal(kx, (N, DIM_X), dtype=jnp.float32)
    t_align = jax.random.uniform(ka, (N, 1), dtype=jnp.float32)
    t = 0.37

    # ---- f32 MXU operands: strict correctness check -------------------------
    kparams_f32 = prepare_params(params, compute_dtype=jnp.float32)

    out0 = odefunc_time_forward(t, y, X, kparams_f32, t_align=None)
    jax.block_until_ready(out0)
    ref0 = _reference(t, y, X, params, t_align=None)
    assert out0.shape == (N, config[-1])
    assert jnp.allclose(out0, ref0, atol=2e-4, rtol=2e-4)

    out1 = odefunc_time_forward(t, y, X, kparams_f32, t_align=t_align)
    jax.block_until_ready(out1)
    ref1 = _reference(t, y, X, params, t_align=t_align)
    assert out1.shape == (N, config[-1])
    assert jnp.allclose(out1, ref1, atol=2e-4, rtol=2e-4)

    # ---- bf16 MXU operands (default perf path; f32 accumulation) ------------
    kparams_bf16 = prepare_params(params, compute_dtype=jnp.bfloat16)
    out2 = odefunc_time_forward(t, y, X, kparams_bf16, t_align=t_align)
    jax.block_until_ready(out2)
    assert jnp.allclose(out2, ref1, atol=5e-2, rtol=5e-2)

    # ---- larger batch: multi-block parallel grid + minimal lane padding -----
    # N2=3000 -> n128=3072 -> 2 blocks of TN=1536 (only 72 padded lanes).
    N2 = 3000
    kb = jax.random.split(key, 3)
    y2 = jax.random.normal(kb[0], (N2, DIM_Y), dtype=jnp.float32)
    X2 = jax.random.normal(kb[1], (N2, DIM_X), dtype=jnp.float32)
    ta2 = jax.random.uniform(kb[2], (N2, 1), dtype=jnp.float32)

    out3 = odefunc_time_forward(t, y2, X2, kparams_bf16, t_align=ta2)
    jax.block_until_ready(out3)
    ref3 = _reference(t, y2, X2, params, t_align=ta2)
    assert out3.shape == (N2, config[-1])
    assert jnp.allclose(out3, ref3, atol=5e-2, rtol=5e-2)

    out4 = odefunc_time_forward(t, y2, X2, kparams_f32, t_align=ta2)
    jax.block_until_ready(out4)
    assert jnp.allclose(out4, ref3, atol=2e-4, rtol=2e-4)

    print("KERNEL_OK")
</pallas_src>

<mosaic_0001>
module attributes {stable_mosaic.version = 11 : i64} {
  func.func @_odefunc_kernel(%arg0: i32, %arg1: memref<1x1xf32, #tpu.memory_space<smem>>, %arg2: memref<31x128xf32, #tpu.memory_space<vmem>>, %arg3: memref<32x31xf32, #tpu.memory_space<vmem>>, %arg4: memref<32x1xf32, #tpu.memory_space<vmem>>, %arg5: memref<32x1xf32, #tpu.memory_space<vmem>>, %arg6: memref<32x32xf32, #tpu.memory_space<vmem>>, %arg7: memref<32x1xf32, #tpu.memory_space<vmem>>, %arg8: memref<16x32xf32, #tpu.memory_space<vmem>>, %arg9: memref<16x1xf32, #tpu.memory_space<vmem>>, %arg10: memref<16x128xf32, #tpu.memory_space<vmem>>) attributes {dimension_semantics = [#tpu.dimension_semantics<parallel>], iteration_bounds = array<i64: 1>, scalar_prefetch = 0 : i64, scratch_operands = 0 : i64, tpu.core_type = #tpu.core_type<tc>, window_params = [{transform_indices = @transform_0, window_bounds = array<i64: 1, 1>}, {transform_indices = @transform_1, window_bounds = array<i64: 31, 128>}, {pipeline_mode = #tpu.pipeline_mode<synchronous>, transform_indices = @transform_2, window_bounds = array<i64: 32, 31>}, {pipeline_mode = #tpu.pipeline_mode<synchronous>, transform_indices = @transform_3, window_bounds = array<i64: 32, 1>}, {pipeline_mode = #tpu.pipeline_mode<synchronous>, transform_indices = @transform_4, window_bounds = array<i64: 32, 1>}, {pipeline_mode = #tpu.pipeline_mode<synchronous>, transform_indices = @transform_5, window_bounds = array<i64: 32, 32>}, {pipeline_mode = #tpu.pipeline_mode<synchronous>, transform_indices = @transform_6, window_bounds = array<i64: 32, 1>}, {pipeline_mode = #tpu.pipeline_mode<synchronous>, transform_indices = @transform_7, window_bounds = array<i64: 16, 32>}, {pipeline_mode = #tpu.pipeline_mode<synchronous>, transform_indices = @transform_8, window_bounds = array<i64: 16, 1>}, {transform_indices = @transform_9, window_bounds = array<i64: 16, 128>}]} {
    %c0 = arith.constant 0 : index
    %c0_0 = arith.constant 0 : index
    %0 = memref.load %arg1[%c0, %c0_0] : memref<1x1xf32, #tpu.memory_space<smem>>
    %c0_1 = arith.constant 0 : index
    %c0_2 = arith.constant 0 : index
    %1 = vector.load %arg3[%c0_1, %c0_2] : memref<32x31xf32, #tpu.memory_space<vmem>>, vector<32x31xf32>
    %c0_3 = arith.constant 0 : index
    %c0_4 = arith.constant 0 : index
    %2 = vector.load %arg2[%c0_3, %c0_4] : memref<31x128xf32, #tpu.memory_space<vmem>>, vector<31x128xf32>
    %cst = arith.constant dense<0.000000e+00> : vector<32x128xf32>
    %3 = tpu.matmul %1, %2, %cst {dimension_numbers = #tpu.dot_dimension_numbers<[1], [0], [0], [1], [0, 0, 1, 1], [], []>} : vector<32x31xf32>, vector<31x128xf32>, vector<32x128xf32> -> vector<32x128xf32>
    %c0_5 = arith.constant 0 : index
    %c0_6 = arith.constant 0 : index
    %4 = vector.load %arg5[%c0_5, %c0_6] : memref<32x1xf32, #tpu.memory_space<vmem>>, vector<32x1xf32>
    %5 = vector.broadcast %4 : vector<32x1xf32> to vector<32x128xf32>
    %6 = arith.addf %3, %5 : vector<32x128xf32>
    %c0_7 = arith.constant 0 : index
    %c0_8 = arith.constant 0 : index
    %7 = vector.load %arg4[%c0_7, %c0_8] : memref<32x1xf32, #tpu.memory_space<vmem>>, vector<32x1xf32>
    %8 = vector.broadcast %0 : f32 to vector<32x1xf32>
    %9 = arith.mulf %8, %7 : vector<32x1xf32>
    %10 = vector.broadcast %9 : vector<32x1xf32> to vector<32x128xf32>
    %11 = arith.addf %6, %10 : vector<32x128xf32>
    %12 = math.tanh %11 : vector<32x128xf32>
    %c0_9 = arith.constant 0 : index
    %c0_10 = arith.constant 0 : index
    %13 = vector.load %arg6[%c0_9, %c0_10] : memref<32x32xf32, #tpu.memory_space<vmem>>, vector<32x32xf32>
    %cst_11 = arith.constant dense<0.000000e+00> : vector<32x128xf32>
    %14 = tpu.matmul %13, %12, %cst_11 {dimension_numbers = #tpu.dot_dimension_numbers<[1], [0], [0], [1], [0, 0, 1, 1], [], []>} : vector<32x32xf32>, vector<32x128xf32>, vector<32x128xf32> -> vector<32x128xf32>
    %c0_12 = arith.constant 0 : index
    %c0_13 = arith.constant 0 : index
    %15 = vector.load %arg7[%c0_12, %c0_13] : memref<32x1xf32, #tpu.memory_space<vmem>>, vector<32x1xf32>
    %16 = vector.broadcast %15 : vector<32x1xf32> to vector<32x128xf32>
    %17 = arith.addf %14, %16 : vector<32x128xf32>
    %18 = math.tanh %17 : vector<32x128xf32>
    %c0_14 = arith.constant 0 : index
    %c0_15 = arith.constant 0 : index
    %19 = vector.load %arg8[%c0_14, %c0_15] : memref<16x32xf32, #tpu.memory_space<vmem>>, vector<16x32xf32>
    %cst_16 = arith.constant dense<0.000000e+00> : vector<16x128xf32>
    %20 = tpu.matmul %19, %18, %cst_16 {dimension_numbers = #tpu.dot_dimension_numbers<[1], [0], [0], [1], [0, 0, 1, 1], [], []>} : vector<16x32xf32>, vector<32x128xf32>, vector<16x128xf32> -> vector<16x128xf32>
    %c0_17 = arith.constant 0 : index
    %c0_18 = arith.constant 0 : index
    %21 = vector.load %arg9[%c0_17, %c0_18] : memref<16x1xf32, #tpu.memory_space<vmem>>, vector<16x1xf32>
    %22 = vector.broadcast %21 : vector<16x1xf32> to vector<16x128xf32>
    %23 = arith.addf %20, %22 : vector<16x128xf32>
    %c0_19 = arith.constant 0 : index
    %c0_20 = arith.constant 0 : index
    %24 = vector.load %arg10[%c0_19, %c0_20] : memref<16x128xf32, #tpu.memory_space<vmem>>, vector<16x128xf32>
    tpu.vector_store %arg10[%c0_19, %c0_20], %23 {strides = array<i32>} : memref<16x128xf32, #tpu.memory_space<vmem>>, vector<16x128xf32>,
    return
  }
  func.func @transform_0(%arg0: i32) -> (i32, i32) {
    %c0_i32 = arith.constant 0 : i32
    %c0_i32_0 = arith.constant 0 : i32
    %c0_i32_1 = arith.constant 0 : i32
    return %c0_i32, %c0_i32_0 : i32, i32
  }
  func.func @transform_1(%arg0: i32) -> (i32, i32) {
    %c0_i32 = arith.constant 0 : i32
    %c0_i32_0 = arith.constant 0 : i32
    return %c0_i32, %arg0 : i32, i32
  }
  func.func @transform_2(%arg0: i32) -> (i32, i32) {
    %c0_i32 = arith.constant 0 : i32
    %c0_i32_0 = arith.constant 0 : i32
    %c0_i32_1 = arith.constant 0 : i32
    return %c0_i32, %c0_i32_0 : i32, i32
  }
  func.func @transform_3(%arg0: i32) -> (i32, i32) {
    %c0_i32 = arith.constant 0 : i32
    %c0_i32_0 = arith.constant 0 : i32
    %c0_i32_1 = arith.constant 0 : i32
    return %c0_i32, %c0_i32_0 : i32, i32
  }
  func.func @transform_4(%arg0: i32) -> (i32, i32) {
    %c0_i32 = arith.constant 0 : i32
    %c0_i32_0 = arith.constant 0 : i32
    %c0_i32_1 = arith.constant 0 : i32
    return %c0_i32, %c0_i32_0 : i32, i32
  }
  func.func @transform_5(%arg0: i32) -> (i32, i32) {
    %c0_i32 = arith.constant 0 : i32
    %c0_i32_0 = arith.constant 0 : i32
    %c0_i32_1 = arith.constant 0 : i32
    return %c0_i32, %c0_i32_0 : i32, i32
  }
  func.func @transform_6(%arg0: i32) -> (i32, i32) {
    %c0_i32 = arith.constant 0 : i32
    %c0_i32_0 = arith.constant 0 : i32
    %c0_i32_1 = arith.constant 0 : i32
    return %c0_i32, %c0_i32_0 : i32, i32
  }
  func.func @transform_7(%arg0: i32) -> (i32, i32) {
    %c0_i32 = arith.constant 0 : i32
    %c0_i32_0 = arith.constant 0 : i32
    %c0_i32_1 = arith.constant 0 : i32
    return %c0_i32, %c0_i32_0 : i32, i32
  }
  func.func @transform_8(%arg0: i32) -> (i32, i32) {
    %c0_i32 = arith.constant 0 : i32
    %c0_i32_0 = arith.constant 0 : i32
    %c0_i32_1 = arith.constant 0 : i32
    return %c0_i32, %c0_i32_0 : i32, i32
  }
  func.func @transform_9(%arg0: i32) -> (i32, i32) {
    %c0_i32 = arith.constant 0 : i32
    %c0_i32_0 = arith.constant 0 : i32
    return %c0_i32, %arg0 : i32, i32
  }
}

</mosaic_0001>

<llo_original>
// kernel: tpu_custom_call.1
$region0: #{tpu_custom_call.1}
  #allocation0 [shape = 'u32[]', space=smem, size = 0x4, offset = 0x4, fixed_abs, tag = 'smem constant byte address 0x4 - core index']
  #allocation1 [shape = 'u32[144,128]{1,0:T(1,128)}', space=vmem, size = 0x12000, scoped, tag = 'internal scratch']
  #allocation2 [shape = 'f32[1,1]{1,0:T(1,128)S(6)}', space=smem, size = 0x200, scoped, tag = 'scoped memory for tpu_custom_call.1']
  %s0 = inlined_call_operand.<no memory space> [shape: f32[1,1], index: 0, kind: input, shape index: {}]
  %s1 = inlined_call_operand.vmem [shape: f32[31,128], index: 1, kind: input, shape index: {}]
  %s2 = inlined_call_operand.vmem [shape: f32[32,31], index: 2, kind: input, shape index: {}]
  %s3 = inlined_call_operand.vmem [shape: f32[32,1], index: 3, kind: input, shape index: {}]
  %s4 = inlined_call_operand.vmem [shape: f32[32,1], index: 4, kind: input, shape index: {}]
  %s5 = inlined_call_operand.vmem [shape: f32[32,32], index: 5, kind: input, shape index: {}]
  %s6 = inlined_call_operand.vmem [shape: f32[32,1], index: 6, kind: input, shape index: {}]
  %s7 = inlined_call_operand.vmem [shape: f32[16,32], index: 7, kind: input, shape index: {}]
  %s8 = inlined_call_operand.vmem [shape: f32[16,1], index: 8, kind: input, shape index: {}]
  %s9 = inlined_call_operand.hbm [shape: f32[16,128], index: 9, kind: output, shape index: {}]
  %s10 = sld [smem:[#allocation0]]
  $region46: #{tpu_custom_call.1} parent=0
    _
  %s12 = ssub.s32 1, %s10
  %s13 = scalar_select 0, %s12, %s10
  %14 = sst [smem:[#allocation2]] %s0
  $region1: #{tpu_custom_call.1} parent=0
    #allocation3 [shape = 'u8[8192]{0}', space=vmem, size = 0x2000, scoped, tag = 'output window, operand 0, single buffered']
    #allocation4 [shape = 's32[1]{0}', space=sflag, size = 0x4, scoped, tag = 'scoped memory for tpu_custom_call.1']
    %15 = vsyncpa [#allocation4], 0
    // Predicated region
    $region2: #{tpu_custom_call.1} parent=1 // pred_check
      _
    $region3: #{tpu_custom_call.1} parent=1 // pred_check_branch
      %17 = sbr.rel (0) target = $region5
    $region4: #{tpu_custom_call.1} parent=1 // pred_region
      _
    $region5: #{tpu_custom_call.1} parent=1 // pred_fallthru
      _
    // Predicated region
    $region6: #{tpu_custom_call.1} parent=1 // pred_check
      _
    $region7: #{tpu_custom_call.1} parent=1 // pred_check_branch
      %19 = sbr.rel (0) target = $region9
    $region8: #{tpu_custom_call.1} parent=1 // pred_region
      _
    $region9: #{tpu_custom_call.1} parent=1 // pred_fallthru
      _
    // Predicated region
    $region10: #{tpu_custom_call.1} parent=1 // pred_check
      _
    $region11: #{tpu_custom_call.1} parent=1 // pred_check_branch
      %21 = sbr.rel (0) target = $region13
    $region12: #{tpu_custom_call.1} parent=1 // pred_region
      _
    $region13: #{tpu_custom_call.1} parent=1 // pred_fallthru
      _
    // Predicated region
    $region14: #{tpu_custom_call.1} parent=1 // pred_check
      _
    $region15: #{tpu_custom_call.1} parent=1 // pred_check_branch
      %23 = sbr.rel (0) target = $region17
    $region16: #{tpu_custom_call.1} parent=1 // pred_region
      _
    $region17: #{tpu_custom_call.1} parent=1 // pred_fallthru
      _
    // Predicated region
    $region18: #{tpu_custom_call.1} parent=1 // pred_check
      _
    $region19: #{tpu_custom_call.1} parent=1 // pred_check_branch
      %25 = sbr.rel (0) target = $region21
    $region20: #{tpu_custom_call.1} parent=1 // pred_region
      _
    $region21: #{tpu_custom_call.1} parent=1 // pred_fallthru
      _
    // Predicated region
    $region22: #{tpu_custom_call.1} parent=1 // pred_check
      _
    $region23: #{tpu_custom_call.1} parent=1 // pred_check_branch
      %27 = sbr.rel (0) target = $region25
    $region24: #{tpu_custom_call.1} parent=1 // pred_region
      _
    $region25: #{tpu_custom_call.1} parent=1 // pred_fallthru
      _
    // Predicated region
    $region26: #{tpu_custom_call.1} parent=1 // pred_check
      _
    $region27: #{tpu_custom_call.1} parent=1 // pred_check_branch
      %29 = sbr.rel (0) target = $region29
    $region28: #{tpu_custom_call.1} parent=1 // pred_region
      _
    $region29: #{tpu_custom_call.1} parent=1 // pred_fallthru
      _
    // Predicated region
    $region30: #{tpu_custom_call.1} parent=1 // pred_check
      _
    $region31: #{tpu_custom_call.1} parent=1 // pred_check_branch
      %31 = sbr.rel (0) target = $region33
    $region32: #{tpu_custom_call.1} parent=1 // pred_region
      _
    $region33: #{tpu_custom_call.1} parent=1 // pred_fallthru
      _
    // Predicated region
    $region34: #{tpu_custom_call.1} parent=1 // pred_check
      _
    $region35: #{tpu_custom_call.1} parent=1 // pred_check_branch
      %33 = sbr.rel (0) target = $region37
    $region36: #{tpu_custom_call.1} parent=1 // pred_region
      _
    $region37: #{tpu_custom_call.1} parent=1 // pred_fallthru
      _
    %s34 = sld [smem:[#allocation2]]
    %v35 = vld [vmem:[%s2] sm:$0xff]
    %v36 = vld [vmem:[%s2 + $0x8] sm:$0xff]
    %v37 = vld [vmem:[%s2 + $0x10] sm:$0xff]
    %v38 = vld [vmem:[%s2 + $0x18] sm:$0xff]
    %v39 = vld [vmem:[%s1] sm:$0xff]
    %v40 = vld [vmem:[%s1 + $0x8] sm:$0xff]
    %v41 = vld [vmem:[%s1 + $0x10] sm:$0xff]
    %v42 = vld [vmem:[%s1 + $0x18] sm:$0x7f]
    %v43 = vld [vmem:[%s4] sm:$0xff]
    %v44 = vld [vmem:[%s4 + $0x8] sm:$0xff]
    %v45 = vld [vmem:[%s4 + $0x10] sm:$0xff]
    %v46 = vld [vmem:[%s4 + $0x18] sm:$0xff]
    %48 = vset.pattern.permute.xlu0 0
    %49 = vperm.xlu0 %48, %v43
    %v50 = vpop.permute.xlu0 %49
    %53 = vset.pattern.permute.xlu0 0
    %54 = vperm.xlu0 %53, %v44
    %v55 = vpop.permute.xlu0 %54
    %58 = vset.pattern.permute.xlu0 0
    %59 = vperm.xlu0 %58, %v45
    %v60 = vpop.permute.xlu0 %59
    %63 = vset.pattern.permute.xlu0 0
    %64 = vperm.xlu0 %63, %v46
    %v65 = vpop.permute.xlu0 %64
    %vm67 = vcmask 252928
    %v69 = vsel %vm67, %v35, 0
    %v72 = vsel %vm67, %v36, 0
    %v75 = vsel %vm67, %v37, 0
    %v78 = vsel %vm67, %v38, 0
    %vm80 = vcmask 1046528
    %v82 = vsel %vm80, %v42, 0
    %84 = vmatprep.subr.mxu0 0.0
    %85 = vmatpush1.msra.mxu0 %v39
    %86 = vmatprep.subr.mxu0 0.0
    %87 = vmatpush1.msra.mxu0 %v40
    %88 = vmatprep.subr.mxu0 0.0
    %89 = vmatpush1.msra.mxu0 %v41
    %90 = vmatprep.subr.mxu0 0.0
    %91 = vmatpush1.msra.mxu0 %v82
    %92 = vmatprep.subr.mxu0 0.0
    %93 = vmatpush1.msra.mxu0 0.0
    %94 = vmatprep.subr.mxu0 0.0
    %95 = vmatpush1.msra.mxu0 0.0
    %96 = vmatprep.subr.mxu0 0.0
    %97 = vmatpush1.msra.mxu0 0.0
    %98 = vmatprep.subr.mxu0 0.0
    %99 = vmatpush1.msra.mxu0 0.0
    %100 = vmatprep.subr.mxu0 0.0
    %101 = vmatpush1.msra.mxu0 0.0
    %102 = vmatprep.subr.mxu0 0.0
    %103 = vmatpush1.msra.mxu0 0.0
    %104 = vmatprep.subr.mxu0 0.0
    %105 = vmatpush1.msra.mxu0 0.0
    %106 = vmatprep.subr.mxu0 0.0
    %107 = vmatpush1.msra.mxu0 0.0
    %108 = vmatprep.subr.mxu0 0.0
    %109 = vmatpush1.msra.mxu0 0.0
    %110 = vmatprep.subr.mxu0 0.0
    %111 = vmatpush1.msra.mxu0 0.0
    %112 = vmatprep.subr.mxu0 0.0
    %113 = vmatpush1.msra.mxu0 0.0
    %114 = vmatprep.subr.mxu0 0.0
    %115 = vmatpush1.msra.mxu0 0.0
    %116 = vmatprep.subr.mxu0 0.0
    %117 = vmatpush1.msra.mxu0 0.0
    %118 = vmatprep.subr.mxu0 0.0
    %119 = vmatpush1.msra.mxu0 0.0
    %120 = vmatprep.subr.mxu0 0.0
    %121 = vmatpush1.msra.mxu0 0.0
    %122 = vmatprep.subr.mxu0 0.0
    %123 = vmatpush1.msra.mxu0 0.0
    %124 = vmatprep.subr.mxu0 0.0
    %125 = vmatpush1.msra.mxu0 0.0
    %126 = vmatprep.subr.mxu0 0.0
    %127 = vmatpush1.msra.mxu0 0.0
    %128 = vmatprep.subr.mxu0 0.0
    %129 = vmatpush1.msra.mxu0 0.0
    %130 = vmatprep.subr.mxu0 0.0
    %131 = vmatpush1.msra.mxu0 0.0
    %132 = vmatprep.subr.mxu0 0.0
    %133 = vmatpush1.msra.mxu0 0.0
    %134 = vmatprep.subr.mxu0 0.0
    %135 = vmatpush1.msra.mxu0 0.0
    %136 = vmatprep.subr.mxu0 0.0
    %137 = vmatpush1.msra.mxu0 0.0
    %138 = vmatprep.subr.mxu0 0.0
    %139 = vmatpush1.msra.mxu0 0.0
    %140 = vmatprep.subr.mxu0 0.0
    %141 = vmatpush1.msra.mxu0 0.0
    %142 = vmatprep.subr.mxu0 0.0
    %143 = vmatpush1.msra.mxu0 0.0
    %144 = vmatprep.subr.mxu0 0.0
    %145 = vmatpush1.msra.mxu0 0.0
    %146 = vmatprep.subr.mxu0 0.0
    %147 = vmatpush1.msra.mxu0 0.0
    %148 = vmatprep.mubr.f32.mxu0 0.0
    %149 = vmatmul.mubr.f32.gmra.mrb[0].mxu0 %v69
    %v150 = vpop.f32.mrb[0].mxu0
    %v151 = vadd.f32 %v50, %v150
    %v152 = vpop.f32.mrb[0].mxu0
    %153 = vmatprep.mubr.f32.mxu0 0.0
    %154 = vmatmul.mubr.f32.gmra.mrb[0].mxu0 %v72
    %v155 = vpop.f32.mrb[0].mxu0
    %v156 = vadd.f32 %v55, %v155
    %v157 = vpop.f32.mrb[0].mxu0
    %158 = vmatprep.mubr.f32.mxu0 0.0
    %159 = vmatmul.mubr.f32.gmra.mrb[0].mxu0 %v75
    %v160 = vpop.f32.mrb[0].mxu0
    %v161 = vadd.f32 %v60, %v160
    %v162 = vpop.f32.mrb[0].mxu0
    %163 = vmatprep.mubr.f32.mxu0 0.0
    %164 = vmatmul.mubr.f32.gmra.mrb[0].mxu0 %v78
    %v165 = vpop.f32.mrb[0].mxu0
    %v166 = vadd.f32 %v65, %v165
    %v167 = vpop.f32.mrb[0].mxu0
    %168 = vdwg.mxu0
    %v169 = vld [vmem:[%s3] sm:$0xff]
    %v170 = vld [vmem:[%s3 + $0x8] sm:$0xff]
    %v171 = vld [vmem:[%s3 + $0x10] sm:$0xff]
    %v172 = vld [vmem:[%s3 + $0x18] sm:$0xff]
    %v173 = vstv %s34
    %v174 = vmul.f32 %v173, %v169
    %v175 = vmul.f32 %v173, %v170
    %v176 = vmul.f32 %v173, %v171
    %v177 = vmul.f32 %v173, %v172
    %179 = vset.pattern.permute.xlu0 0
    %180 = vperm.xlu0 %179, %v174
    %v181 = vpop.permute.xlu0 %180
    %184 = vset.pattern.permute.xlu0 0
    %185 = vperm.xlu0 %184, %v175
    %v186 = vpop.permute.xlu0 %185
    %189 = vset.pattern.permute.xlu0 0
    %190 = vperm.xlu0 %189, %v176
    %v191 = vpop.permute.xlu0 %190
    %194 = vset.pattern.permute.xlu0 0
    %195 = vperm.xlu0 %194, %v177
    %v196 = vpop.permute.xlu0 %195
    %v198 = vadd.f32 %v151, %v181
    %v199 = vadd.f32 %v156, %v186
    %v200 = vadd.f32 %v161, %v191
    %v201 = vadd.f32 %v166, %v196
    %v202 = vtanh.pop %v198
    %v203 = vtanh.pop %v199
    %v204 = vtanh.pop %v200
    %v205 = vtanh.pop %v201
    %v206 = vld [vmem:[%s5] sm:$0xff]
    %v207 = vld [vmem:[%s5 + $0x8] sm:$0xff]
    %v208 = vld [vmem:[%s5 + $0x10] sm:$0xff]
    %v209 = vld [vmem:[%s5 + $0x18] sm:$0xff]
    %v210 = vld [vmem:[%s6] sm:$0xff]
    %v211 = vld [vmem:[%s6 + $0x8] sm:$0xff]
    %v212 = vld [vmem:[%s6 + $0x10] sm:$0xff]
    %v213 = vld [vmem:[%s6 + $0x18] sm:$0xff]
    %215 = vset.pattern.permute.xlu0 0
    %216 = vperm.xlu0 %215, %v210
    %v217 = vpop.permute.xlu0 %216
    %220 = vset.pattern.permute.xlu0 0
    %221 = vperm.xlu0 %220, %v211
    %v222 = vpop.permute.xlu0 %221
    %225 = vset.pattern.permute.xlu0 0
    %226 = vperm.xlu0 %225, %v212
    %v227 = vpop.permute.xlu0 %226
    %230 = vset.pattern.permute.xlu0 0
    %231 = vperm.xlu0 %230, %v213
    %v232 = vpop.permute.xlu0 %231
    %vm234 = vcmask 261120
    %v236 = vsel %vm234, %v206, 0
    %v239 = vsel %vm234, %v207, 0
    %v242 = vsel %vm234, %v208, 0
    %v245 = vsel %vm234, %v209, 0
    %247 = vmatprep.subr.mxu0 0.0
    %248 = vmatpush1.msra.mxu0 %v202
    %249 = vmatprep.subr.mxu0 0.0
    %250 = vmatpush1.msra.mxu0 %v203
    %251 = vmatprep.subr.mxu0 0.0
    %252 = vmatpush1.msra.mxu0 %v204
    %253 = vmatprep.subr.mxu0 0.0
    %254 = vmatpush1.msra.mxu0 %v205
    %255 = vmatprep.subr.mxu0 0.0
    %256 = vmatpush1.msra.mxu0 0.0
    %257 = vmatprep.subr.mxu0 0.0
    %258 = vmatpush1.msra.mxu0 0.0
    %259 = vmatprep.subr.mxu0 0.0
    %260 = vmatpush1.msra.mxu0 0.0
    %261 = vmatprep.subr.mxu0 0.0
    %262 = vmatpush1.msra.mxu0 0.0
    %263 = vmatprep.subr.mxu0 0.0
    %264 = vmatpush1.msra.mxu0 0.0
    %265 = vmatprep.subr.mxu0 0.0
    %266 = vmatpush1.msra.mxu0 0.0
    %267 = vmatprep.subr.mxu0 0.0
    %268 = vmatpush1.msra.mxu0 0.0
    %269 = vmatprep.subr.mxu0 0.0
    %270 = vmatpush1.msra.mxu0 0.0
    %271 = vmatprep.subr.mxu0 0.0
    %272 = vmatpush1.msra.mxu0 0.0
    %273 = vmatprep.subr.mxu0 0.0
    %274 = vmatpush1.msra.mxu0 0.0
    %275 = vmatprep.subr.mxu0 0.0
    %276 = vmatpush1.msra.mxu0 0.0
    %277 = vmatprep.subr.mxu0 0.0
    %278 = vmatpush1.msra.mxu0 0.0
    %279 = vmatprep.subr.mxu0 0.0
    %280 = vmatpush1.msra.mxu0 0.0
    %281 = vmatprep.subr.mxu0 0.0
    %282 = vmatpush1.msra.mxu0 0.0
    %283 = vmatprep.subr.mxu0 0.0
    %284 = vmatpush1.msra.mxu0 0.0
    %285 = vmatprep.subr.mxu0 0.0
    %286 = vmatpush1.msra.mxu0 0.0
    %287 = vmatprep.subr.mxu0 0.0
    %288 = vmatpush1.msra.mxu0 0.0
    %289 = vmatprep.subr.mxu0 0.0
    %290 = vmatpush1.msra.mxu0 0.0
    %291 = vmatprep.subr.mxu0 0.0
    %292 = vmatpush1.msra.mxu0 0.0
    %293 = vmatprep.subr.mxu0 0.0
    %294 = vmatpush1.msra.mxu0 0.0
    %295 = vmatprep.subr.mxu0 0.0
    %296 = vmatpush1.msra.mxu0 0.0
    %297 = vmatprep.subr.mxu0 0.0
    %298 = vmatpush1.msra.mxu0 0.0
    %299 = vmatprep.subr.mxu0 0.0
    %300 = vmatpush1.msra.mxu0 0.0
    %301 = vmatprep.subr.mxu0 0.0
    %302 = vmatpush1.msra.mxu0 0.0
    %303 = vmatprep.subr.mxu0 0.0
    %304 = vmatpush1.msra.mxu0 0.0
    %305 = vmatprep.subr.mxu0 0.0
    %306 = vmatpush1.msra.mxu0 0.0
    %307 = vmatprep.subr.mxu0 0.0
    %308 = vmatpush1.msra.mxu0 0.0
    %309 = vmatprep.subr.mxu0 0.0
    %310 = vmatpush1.msra.mxu0 0.0
    %311 = vmatprep.mubr.f32.mxu0 0.0
    %312 = vmatmul.mubr.f32.gmra.mrb[0].mxu0 %v236
    %v313 = vpop.f32.mrb[0].mxu0
    %v314 = vadd.f32 %v217, %v313
    %v315 = vpop.f32.mrb[0].mxu0
    %316 = vmatprep.mubr.f32.mxu0 0.0
    %317 = vmatmul.mubr.f32.gmra.mrb[0].mxu0 %v239
    %v318 = vpop.f32.mrb[0].mxu0
    %v319 = vadd.f32 %v222, %v318
    %v320 = vpop.f32.mrb[0].mxu0
    %321 = vmatprep.mubr.f32.mxu0 0.0
    %322 = vmatmul.mubr.f32.gmra.mrb[0].mxu0 %v242
    %v323 = vpop.f32.mrb[0].mxu0
    %v324 = vadd.f32 %v227, %v323
    %v325 = vpop.f32.mrb[0].mxu0
    %326 = vmatprep.mubr.f32.mxu0 0.0
    %327 = vmatmul.mubr.f32.gmra.mrb[0].mxu0 %v245
    %v328 = vpop.f32.mrb[0].mxu0
    %v329 = vadd.f32 %v232, %v328
    %v330 = vpop.f32.mrb[0].mxu0
    %331 = vdwg.mxu0
    %v332 = vtanh.pop %v314
    %v333 = vtanh.pop %v319
    %v334 = vtanh.pop %v324
    %v335 = vtanh.pop %v329
    %v336 = vld [vmem:[%s7] sm:$0xff]
    %v337 = vld [vmem:[%s7 + $0x8] sm:$0xff]
    %v338 = vld [vmem:[%s8] sm:$0xff]
    %v339 = vld [vmem:[%s8 + $0x8] sm:$0xff]
    %341 = vset.pattern.permute.xlu0 0
    %342 = vperm.xlu0 %341, %v338
    %v343 = vpop.permute.xlu0 %342
    %346 = vset.pattern.permute.xlu0 0
    %347 = vperm.xlu0 %346, %v339
    %v348 = vpop.permute.xlu0 %347
    %v351 = vsel %vm234, %v336, 0
    %v354 = vsel %vm234, %v337, 0
    %356 = vmatprep.subr.mxu0 0.0
    %357 = vmatpush1.msra.mxu0 %v332
    %358 = vmatprep.subr.mxu0 0.0
    %359 = vmatpush1.msra.mxu0 %v333
    %360 = vmatprep.subr.mxu0 0.0
    %361 = vmatpush1.msra.mxu0 %v334
    %362 = vmatprep.subr.mxu0 0.0
    %363 = vmatpush1.msra.mxu0 %v335
    %364 = vmatprep.subr.mxu0 0.0
    %365 = vmatpush1.msra.mxu0 0.0
    %366 = vmatprep.subr.mxu0 0.0
    %367 = vmatpush1.msra.mxu0 0.0
    %368 = vmatprep.subr.mxu0 0.0
    %369 = vmatpush1.msra.mxu0 0.0
    %370 = vmatprep.subr.mxu0 0.0
    %371 = vmatpush1.msra.mxu0 0.0
    %372 = vmatprep.subr.mxu0 0.0
    %373 = vmatpush1.msra.mxu0 0.0
    %374 = vmatprep.subr.mxu0 0.0
    %375 = vmatpush1.msra.mxu0 0.0
    %376 = vmatprep.subr.mxu0 0.0
    %377 = vmatpush1.msra.mxu0 0.0
    %378 = vmatprep.subr.mxu0 0.0
    %379 = vmatpush1.msra.mxu0 0.0
    %380 = vmatprep.subr.mxu0 0.0
    %381 = vmatpush1.msra.mxu0 0.0
    %382 = vmatprep.subr.mxu0 0.0
    %383 = vmatpush1.msra.mxu0 0.0
    %384 = vmatprep.subr.mxu0 0.0
    %385 = vmatpush1.msra.mxu0 0.0
    %386 = vmatprep.subr.mxu0 0.0
    %387 = vmatpush1.msra.mxu0 0.0
    %388 = vmatprep.subr.mxu0 0.0
    %389 = vmatpush1.msra.mxu0 0.0
    %390 = vmatprep.subr.mxu0 0.0
    %391 = vmatpush1.msra.mxu0 0.0
    %392 = vmatprep.subr.mxu0 0.0
    %393 = vmatpush1.msra.mxu0 0.0
    %394 = vmatprep.subr.mxu0 0.0
    %395 = vmatpush1.msra.mxu0 0.0
    %396 = vmatprep.subr.mxu0 0.0
    %397 = vmatpush1.msra.mxu0 0.0
    %398 = vmatprep.subr.mxu0 0.0
    %399 = vmatpush1.msra.mxu0 0.0
    %400 = vmatprep.subr.mxu0 0.0
    %401 = vmatpush1.msra.mxu0 0.0
    %402 = vmatprep.subr.mxu0 0.0
    %403 = vmatpush1.msra.mxu0 0.0
    %404 = vmatprep.subr.mxu0 0.0
    %405 = vmatpush1.msra.mxu0 0.0
    %406 = vmatprep.subr.mxu0 0.0
    %407 = vmatpush1.msra.mxu0 0.0
    %408 = vmatprep.subr.mxu0 0.0
    %409 = vmatpush1.msra.mxu0 0.0
    %410 = vmatprep.subr.mxu0 0.0
    %411 = vmatpush1.msra.mxu0 0.0
    %412 = vmatprep.subr.mxu0 0.0
    %413 = vmatpush1.msra.mxu0 0.0
    %414 = vmatprep.subr.mxu0 0.0
    %415 = vmatpush1.msra.mxu0 0.0
    %416 = vmatprep.subr.mxu0 0.0
    %417 = vmatpush1.msra.mxu0 0.0
    %418 = vmatprep.subr.mxu0 0.0
    %419 = vmatpush1.msra.mxu0 0.0
    %420 = vmatprep.mubr.f32.mxu0 0.0
    %421 = vmatmul.mubr.f32.gmra.mrb[0].mxu0 %v351
    %v422 = vpop.f32.mrb[0].mxu0
    %v423 = vadd.f32 %v343, %v422
    %v424 = vpop.f32.mrb[0].mxu0
    %425 = vmatprep.mubr.f32.mxu0 0.0
    %426 = vmatmul.mubr.f32.gmra.mrb[0].mxu0 %v354
    %v427 = vpop.f32.mrb[0].mxu0
    %v428 = vadd.f32 %v348, %v427
    %v429 = vpop.f32.mrb[0].mxu0
    %430 = vdwg.mxu0
    %431 = vst [vmem:[#allocation3] sm:$0xff] %v423
    %432 = vst [vmem:[#allocation3 + $0x8] sm:$0xff] %v428
    // Predicated region
    $region38: #{tpu_custom_call.1} parent=1 // pred_check
      _
    $region39: #{tpu_custom_call.1} parent=1 // pred_check_branch
      %434 = sbr.rel (0) target = $region41
    $region40: #{tpu_custom_call.1} parent=1 // pred_region
      %s436 = ssub.s32 256, 256
      %437 = vsyncadd [#allocation4], %s436
      %s438 = sshll.u32 [#allocation3], 4
      %s439 = int_to_ptr.vmem [resolvable:$true] %s438
      %444 = dma.vmem_to_hbm [thread:$0]  %s439, 256, %s9, [#allocation4], 128, 128, 8
    $region41: #{tpu_custom_call.1} parent=1 // pred_fallthru
      _
    // Predicated region
    $region42: #{tpu_custom_call.1} parent=1 // pred_check
      _
    $region43: #{tpu_custom_call.1} parent=1 // pred_check_branch
      %446 = sbr.rel (0) target = $region45
    $region44: #{tpu_custom_call.1} parent=1 // pred_region
      %447 = dma.done [#allocation4], 256
    $region45: #{tpu_custom_call.1} parent=1 // pred_fallthru
      _
    %448 = vsyncpa [#allocation4], 1

</llo_original>
